<compile_context>
chip_gen: v7x
topology: tpu7x:2x2x1
jax: 0.10.0
libtpu: 0.0.40
codegen_flags: <defaults>
</compile_context>

<pallas_src>
import math

import numpy as np
import jax
import jax.numpy as jnp
from jax.experimental import pallas as pl
from jax.experimental.pallas import tpu as pltpu

# ----------------------------- configuration ---------------------------------
W_DIM = 32          # style vector dim
OUT_CHANNELS = 32   # block out_channels (== conv1 in/out channels, == const channels)
IMG_CHANNELS = 3    # torgb out channels
IMG_PAD = 8         # torgb out channels padded to a full sublane tile
RESOLUTION = 16     # block resolution (first-block style: in resolution == resolution)
KSIZE = 3
LORA_R = 4
LORA_ALPHA = 1
CONV_CLAMP = 256.0

LORA_SCALING = float(LORA_ALPHA) if LORA_ALPHA > 0 else float(LORA_R)   # per Ada*Wrapper
RANKNUM = float(LORA_R)
LORA_FACTOR = LORA_SCALING / (RANKNUM + 1e-5)
AFFINE_WG = 1.0 / math.sqrt(W_DIM)                  # FullyConnectedLayer weight_gain (lr_mult=1)
TORGB_WG = 1.0 / math.sqrt(OUT_CHANNELS * 1 * 1)    # ToRGBLayer weight_gain (folded into styles)
ACT_GAIN = math.sqrt(2.0)                           # lrelu def gain

HW = RESOLUTION * RESOLUTION
K9 = KSIZE * KSIZE * OUT_CHANNELS                   # 288: contraction depth of the fused conv matmul

# packed-parameter slab layout (rows x 256 lanes), all offsets sublane-tile friendly
_OC = OUT_CHANNELS
_AFFB_ROW = 2 * _OC                 # 64 : affine bias row (cols 0:64)
_W2_ROWS = (2 * _OC, 2 * _OC + IMG_PAD)   # 64:72 : torgb weight (cols 64:96) + bias col (col 96)
_NOISE_ROW = 2 * _OC + IMG_PAD      # 72 : noise row * act_gain (all HW lanes)
SLAB_ROWS = 80
SLAB_COLS = HW                      # 256


# ------------------------- fused whole-block kernel ---------------------------
def _make_block_kernel(B):
    OC = OUT_CHANNELS

    def kernel(ws_ref, patch_ref, w1_ref, slab_ref, out_ref):
        # ---- unpack the packed-parameter slab (static slices) ----
        A_blk = slab_ref[0:2 * OC, 0:2 * OC]                    # [64,64] block-diag LoRA-folded affines
        aff_b = slab_ref[_AFFB_ROW:_AFFB_ROW + 1, 0:2 * OC]     # [1,64]  affine biases (torgb wg folded)
        b1_col = slab_ref[0:OC, 2 * OC:2 * OC + 1]              # [OC,1]  conv1 bias * act_gain
        w2 = slab_ref[_W2_ROWS[0]:_W2_ROWS[1], 2 * OC:3 * OC]   # [8,32]  torgb weight (padded rows)
        b2_col = slab_ref[_W2_ROWS[0]:_W2_ROWS[1], 3 * OC:3 * OC + 1]   # [8,1]
        noise = slab_ref[_NOISE_ROW:_NOISE_ROW + 1, :]          # [1,HW]  const noise * act_gain

        patches = patch_ref[...]                                # [288, HW] im2col of const (precomputed)
        w1 = w1_ref[...]                                        # [OC, 288] conv1 weight, K = (kh,kw,ic)

        # ---- both LoRA-folded affines in one block-diagonal matmul: [B, 2*OC] ----
        s12 = jnp.dot(ws_ref[...], A_blk, preferred_element_type=jnp.float32) + aff_b

        for b in range(B):
            s1 = s12[b:b + 1, 0:OC]            # [1, OC] conv1 styles
            s2 = s12[b:b + 1, OC:2 * OC]       # [1, OC] torgb styles (weight_gain already folded)

            # conv1: modulate-the-weights, demodulate from the modulated weight, ONE K=288 matmul.
            wm = w1 * jnp.concatenate([s1] * (KSIZE * KSIZE), axis=1)          # [OC, 288]
            d = jax.lax.rsqrt(jnp.sum(wm * wm, axis=1, keepdims=True) + 1e-8) * ACT_GAIN   # [OC,1]
            z = jnp.dot(wm * d, patches, preferred_element_type=jnp.float32)   # [OC, HW]
            z = z + noise + b1_col                                             # noise/bias carry act_gain
            y1 = jnp.clip(jnp.maximum(z, 0.2 * z), -CONV_CLAMP, CONV_CLAMP)    # lrelu*sqrt2 (folded), clamp

            # torgb: 1x1 modulated conv (no demod) + bias + clamp
            y2 = jnp.dot(w2 * s2, y1, preferred_element_type=jnp.float32) + b2_col   # [IMG_PAD, HW]
            y2 = jnp.clip(y2, -CONV_CLAMP, CONV_CLAMP)

            out_ref[b] = jnp.concatenate([y1, y2], axis=0)      # [OC+IMG_PAD, HW] lane-dense store

    return kernel


def _full_spec(shape):
    nd = len(shape)
    return pl.BlockSpec(shape, lambda i, _nd=nd: (0,) * _nd)


# ------------------------- wrapper (parameter prep + launch) -------------------
def _conv_lora_delta(A, E, Bm, weight_shape):
    return (Bm @ (A * E)).reshape(weight_shape) * LORA_FACTOR


def _fc_eff_T(w, A, E, Bm):
    """LoRA-folded FullyConnectedLayer weight for y = x @ W_eff.T, returned transposed: [in, out]."""
    w_eff = w * AFFINE_WG + (Bm @ (A * E)) * LORA_FACTOR
    return w_eff.T


def ada_synthesis_block_forward(params, ws):
    """AdaSynthesisBlockWrapper.forward(x=None, img=None, ws, noise_mode='const',
    fused_modconv=True, force_fp32=True) -> (x, img)."""
    B = ws.shape[0]
    R, OC = RESOLUTION, OUT_CHANNELS
    c1, rgb = params['conv1'], params['torgb']

    # ---- batch-independent parameter prep (tiny XLA ops outside the kernel) ----
    w1_eff = c1['weight'] + _conv_lora_delta(c1['lora_A'], c1['lora_E'], c1['lora_B'],
                                             c1['weight'].shape)
    w1_flat = jnp.transpose(w1_eff, (0, 2, 3, 1)).reshape(OC, K9)        # K axis = (kh, kw, ic)
    w2_eff = rgb['weight'] + _conv_lora_delta(rgb['lora_A'], rgb['lora_E'], rgb['lora_B'],
                                              rgb['weight'].shape)
    w2_pad = jnp.zeros((IMG_PAD, OC), jnp.float32).at[:IMG_CHANNELS].set(
        w2_eff.reshape(IMG_CHANNELS, OC))
    b2_pad = jnp.zeros((IMG_PAD,), jnp.float32).at[:IMG_CHANNELS].set(rgb['bias'])

    # im2col of the shared constant block input (valid only because in_channels == 0)
    cpad = jnp.pad(params['const'], ((0, 0), (1, 1), (1, 1)))
    patches = jnp.concatenate(
        [cpad[:, kh:kh + R, kw:kw + R].reshape(OC, HW)
         for kh in range(KSIZE) for kw in range(KSIZE)], axis=0)         # [288, HW]

    # LoRA-folded affine weights (transposed); torgb weight_gain folded into its affine weight+bias
    A1 = _fc_eff_T(c1['affine_w'], c1['affine_lora_A'], c1['affine_lora_E'], c1['affine_lora_B'])
    A2 = _fc_eff_T(rgb['affine_w'], rgb['affine_lora_A'], rgb['affine_lora_E'], rgb['affine_lora_B'])
    A2 = A2 * TORGB_WG
    ab1 = c1['affine_b']                    # bias_gain == 1
    ab2 = rgb['affine_b'] * TORGB_WG

    noise_row = (c1['noise_const'] * c1['noise_strength']).reshape(HW) * ACT_GAIN

    # ---- pack all small parameters into one VMEM slab (one DMA instead of ~a dozen) ----
    slab = jnp.zeros((SLAB_ROWS, SLAB_COLS), jnp.float32)
    slab = slab.at[0:OC, 0:OC].set(A1)                                   # block-diag affine weights
    slab = slab.at[OC:2 * OC, OC:2 * OC].set(A2)
    slab = slab.at[_AFFB_ROW, 0:OC].set(ab1)                             # affine bias row
    slab = slab.at[_AFFB_ROW, OC:2 * OC].set(ab2)
    slab = slab.at[0:OC, 2 * OC].set(c1['bias'] * ACT_GAIN)              # conv1 bias col (gain folded)
    slab = slab.at[_W2_ROWS[0]:_W2_ROWS[1], 2 * OC:3 * OC].set(w2_pad)   # torgb weight
    slab = slab.at[_W2_ROWS[0]:_W2_ROWS[1], 3 * OC].set(b2_pad)          # torgb bias col
    slab = slab.at[_NOISE_ROW, :].set(noise_row)                         # noise row (gain folded)

    ws_cat = jnp.concatenate([ws[:, 0], ws[:, 1]], axis=1)               # [B, 2*W_DIM]

    inputs = (ws_cat, patches, w1_flat, slab)
    # grid=(1,): single TC step.  NOTE(v7x): with 2 TCs, split the batch over a "parallel" grid axis only
    # when B / resolution grow; at B=2 / R=16 the duplicated weight DMA + per-step overhead outweigh it.
    out = pl.pallas_call(
        _make_block_kernel(B),
        out_shape=jax.ShapeDtypeStruct((B, OC + IMG_PAD, HW), jnp.float32),
        grid=(1,),
        in_specs=[_full_spec(a.shape) for a in inputs],
        out_specs=_full_spec((B, OC + IMG_PAD, HW)),
        compiler_params=pltpu.CompilerParams(dimension_semantics=("arbitrary",)),
    )(*inputs)

    x = out[:, :OC].reshape(B, OC, R, R)
    img = out[:, OC:OC + IMG_CHANNELS].reshape(B, IMG_CHANNELS, R, R)
    return x, img


# ------------------------- deterministic parameter init -----------------------
def init_params(key):
    ks = list(jax.random.split(key, 32))
    it = iter(range(32))

    def nrm(shape, scale=1.0):
        return scale * jax.random.normal(ks[next(it)], shape, jnp.float32)

    params = {
        'const': nrm((OUT_CHANNELS, RESOLUTION, RESOLUTION)),
        'conv1': {
            'weight': nrm((OUT_CHANNELS, OUT_CHANNELS, 3, 3)),
            'bias': nrm((OUT_CHANNELS,), 0.1),
            'noise_const': nrm((RESOLUTION, RESOLUTION)),
            'noise_strength': jnp.array(0.1, jnp.float32),
            'affine_w': nrm((OUT_CHANNELS, W_DIM)),
            'affine_b': jnp.ones((OUT_CHANNELS,), jnp.float32),      # bias_init=1
            'affine_lora_A': nrm((LORA_R, W_DIM), 0.02),
            'affine_lora_B': nrm((OUT_CHANNELS, LORA_R), 0.02),
            'affine_lora_E': nrm((LORA_R, 1), 0.02),                 # nonzero to exercise LoRA
            'lora_A': nrm((LORA_R * 3, OUT_CHANNELS * 3), 0.02),
            'lora_B': nrm((OUT_CHANNELS * 3, LORA_R * 3), 0.02),
            'lora_E': nrm((LORA_R * 3, 1), 0.02),
        },
        'torgb': {
            'weight': nrm((IMG_CHANNELS, OUT_CHANNELS, 1, 1)),
            'bias': nrm((IMG_CHANNELS,), 0.1),
            'affine_w': nrm((OUT_CHANNELS, W_DIM)),
            'affine_b': jnp.ones((OUT_CHANNELS,), jnp.float32),
            'affine_lora_A': nrm((LORA_R, W_DIM), 0.02),
            'affine_lora_B': nrm((OUT_CHANNELS, LORA_R), 0.02),
            'affine_lora_E': nrm((LORA_R, 1), 0.02),
            'lora_A': nrm((LORA_R * 1, OUT_CHANNELS * 1), 0.02),
            'lora_B': nrm((IMG_CHANNELS * 1, LORA_R * 1), 0.02),
            'lora_E': nrm((LORA_R * 1, 1), 0.02),
        },
    }
    return params


# ----------------------------- pure-JAX reference -----------------------------
_HI = jax.lax.Precision.HIGHEST


def _ref_fc(x, w, b, A, E, Bm, wg, bg, scaling, ranknum):
    res = jnp.dot(x, (w * wg).T, precision=_HI) + b * bg
    lora = jnp.dot(jnp.dot(x, (A * E).T, precision=_HI), Bm.T, precision=_HI)
    return res + lora * (scaling / (ranknum + 1e-5))


def _ref_modconv(x, weight, styles, noise, demodulate, padding):
    B = x.shape[0]
    w = weight[None] * styles[:, None, :, None, None]
    if demodulate:
        d = jax.lax.rsqrt(jnp.sum(w * w, axis=(2, 3, 4)) + 1e-8)
        w = w * d[:, :, None, None, None]
    outs = []
    for b in range(B):
        outs.append(jax.lax.conv_general_dilated(
            x[b:b + 1], w[b], (1, 1), [(padding, padding)] * 2,
            dimension_numbers=('NCHW', 'OIHW', 'NCHW'), precision=_HI))
    y = jnp.concatenate(outs, axis=0)
    if noise is not None:
        y = y + noise
    return y


def _ref_bias_act(x, b, act, gain, clamp):
    y = x + b.reshape(1, -1, 1, 1)
    if act == 'lrelu':
        y = jnp.where(y >= 0, y, 0.2 * y)
    y = y * gain
    if clamp is not None:
        y = jnp.clip(y, -clamp, clamp)
    return y


def ref_forward(params, ws):
    B = ws.shape[0]
    c1, rgb = params['conv1'], params['torgb']
    x = jnp.broadcast_to(params['const'][None], (B, OUT_CHANNELS, RESOLUTION, RESOLUTION))
    s1 = _ref_fc(ws[:, 0], c1['affine_w'], c1['affine_b'], c1['affine_lora_A'],
                 c1['affine_lora_E'], c1['affine_lora_B'], AFFINE_WG, 1.0, LORA_SCALING, RANKNUM)
    w1 = c1['weight'] + (c1['lora_B'] @ (c1['lora_A'] * c1['lora_E'])
                         ).reshape(c1['weight'].shape) * LORA_FACTOR
    noise = c1['noise_const'] * c1['noise_strength']
    x = _ref_modconv(x, w1, s1, noise, True, 1)
    x = _ref_bias_act(x, c1['bias'], 'lrelu', math.sqrt(2.0), CONV_CLAMP)
    s2 = _ref_fc(ws[:, 1], rgb['affine_w'], rgb['affine_b'], rgb['affine_lora_A'],
                 rgb['affine_lora_E'], rgb['affine_lora_B'], AFFINE_WG, 1.0, LORA_SCALING, RANKNUM)
    s2 = s2 * TORGB_WG
    w2 = rgb['weight'] + (rgb['lora_B'] @ (rgb['lora_A'] * rgb['lora_E'])
                          ).reshape(rgb['weight'].shape) * LORA_FACTOR
    y = _ref_modconv(x, w2, s2, None, False, 0)
    img = _ref_bias_act(y, rgb['bias'], 'linear', 1.0, CONV_CLAMP).astype(jnp.float32)
    return x, img


# ----------------------------------- main --------------------------------------
if __name__ == "__main__":
    key = jax.random.PRNGKey(0)
    pkey, wkey = jax.random.split(key)
    params = init_params(pkey)

    B = 2
    # ws: [batch, num_conv + num_torgb = 2, w_dim]
    ws = jax.random.normal(wkey, (B, 2, W_DIM), jnp.float32)

    fwd = jax.jit(ada_synthesis_block_forward)
    x_out, img_out = fwd(params, ws)
    jax.block_until_ready((x_out, img_out))

    x_ref, img_ref = ref_forward(params, ws)
    np.testing.assert_allclose(np.asarray(x_out), np.asarray(x_ref), rtol=2e-4, atol=2e-4)
    np.testing.assert_allclose(np.asarray(img_out), np.asarray(img_ref), rtol=2e-4, atol=2e-4)

    print("KERNEL_OK")
</pallas_src>

<mosaic_0001>
module attributes {stable_mosaic.version = 11 : i64} {
  func.func @kernel(%arg0: i32, %arg1: memref<2x64xf32, #tpu.memory_space<vmem>>, %arg2: memref<288x256xf32, #tpu.memory_space<vmem>>, %arg3: memref<32x288xf32, #tpu.memory_space<vmem>>, %arg4: memref<80x256xf32, #tpu.memory_space<vmem>>, %arg5: memref<2x40x256xf32, #tpu.memory_space<vmem>>) attributes {dimension_semantics = [#tpu.dimension_semantics<arbitrary>], iteration_bounds = array<i64: 1>, scalar_prefetch = 0 : i64, scratch_operands = 0 : i64, tpu.core_type = #tpu.core_type<tc>, window_params = [{pipeline_mode = #tpu.pipeline_mode<synchronous>, transform_indices = @transform_0, window_bounds = array<i64: 2, 64>}, {pipeline_mode = #tpu.pipeline_mode<synchronous>, transform_indices = @transform_1, window_bounds = array<i64: 288, 256>}, {pipeline_mode = #tpu.pipeline_mode<synchronous>, transform_indices = @transform_2, window_bounds = array<i64: 32, 288>}, {pipeline_mode = #tpu.pipeline_mode<synchronous>, transform_indices = @transform_3, window_bounds = array<i64: 80, 256>}, {pipeline_mode = #tpu.pipeline_mode<synchronous>, transform_indices = @transform_4, window_bounds = array<i64: 2, 40, 256>}]} {
    %c0 = arith.constant 0 : index
    %c0_0 = arith.constant 0 : index
    %0 = vector.load %arg4[%c0, %c0_0] : memref<80x256xf32, #tpu.memory_space<vmem>>, vector<64x64xf32>
    %c64 = arith.constant 64 : index
    %c0_1 = arith.constant 0 : index
    %1 = vector.load %arg4[%c64, %c0_1] : memref<80x256xf32, #tpu.memory_space<vmem>>, vector<1x64xf32>
    %c0_2 = arith.constant 0 : index
    %c64_3 = arith.constant 64 : index
    %2 = vector.load %arg4[%c0_2, %c64_3] : memref<80x256xf32, #tpu.memory_space<vmem>>, vector<32x1xf32>
    %c64_4 = arith.constant 64 : index
    %c64_5 = arith.constant 64 : index
    %3 = vector.load %arg4[%c64_4, %c64_5] : memref<80x256xf32, #tpu.memory_space<vmem>>, vector<8x32xf32>
    %c64_6 = arith.constant 64 : index
    %c96 = arith.constant 96 : index
    %4 = vector.load %arg4[%c64_6, %c96] : memref<80x256xf32, #tpu.memory_space<vmem>>, vector<8x1xf32>
    %c72 = arith.constant 72 : index
    %c0_7 = arith.constant 0 : index
    %5 = vector.load %arg4[%c72, %c0_7] : memref<80x256xf32, #tpu.memory_space<vmem>>, vector<1x256xf32>
    %c0_8 = arith.constant 0 : index
    %c0_9 = arith.constant 0 : index
    %6 = vector.load %arg2[%c0_8, %c0_9] : memref<288x256xf32, #tpu.memory_space<vmem>>, vector<288x256xf32>
    %c0_10 = arith.constant 0 : index
    %c0_11 = arith.constant 0 : index
    %7 = vector.load %arg3[%c0_10, %c0_11] : memref<32x288xf32, #tpu.memory_space<vmem>>, vector<32x288xf32>
    %c0_12 = arith.constant 0 : index
    %c0_13 = arith.constant 0 : index
    %8 = vector.load %arg1[%c0_12, %c0_13] : memref<2x64xf32, #tpu.memory_space<vmem>>, vector<2x64xf32>
    %cst = arith.constant dense<0.000000e+00> : vector<2x64xf32>
    %9 = tpu.matmul %8, %0, %cst {dimension_numbers = #tpu.dot_dimension_numbers<[1], [0], [0], [1], [0, 0, 1, 1], [], []>} : vector<2x64xf32>, vector<64x64xf32>, vector<2x64xf32> -> vector<2x64xf32>
    %10 = vector.broadcast %1 : vector<1x64xf32> to vector<2x64xf32>
    %11 = arith.addf %9, %10 : vector<2x64xf32>
    %12 = vector.extract_strided_slice %11 {offsets = [0, 0], sizes = [1, 32], strides = [1, 1]} : vector<2x64xf32> to vector<1x32xf32>
    %13 = vector.extract_strided_slice %11 {offsets = [0, 32], sizes = [1, 32], strides = [1, 1]} : vector<2x64xf32> to vector<1x32xf32>
    %14 = tpu.concatenate %12, %12, %12, %12, %12, %12, %12, %12, %12 in 1 : vector<1x32xf32>, vector<1x32xf32>, vector<1x32xf32>, vector<1x32xf32>, vector<1x32xf32>, vector<1x32xf32>, vector<1x32xf32>, vector<1x32xf32>, vector<1x32xf32> -> vector<1x288xf32>
    %15 = vector.broadcast %14 : vector<1x288xf32> to vector<32x288xf32>
    %16 = arith.mulf %7, %15 : vector<32x288xf32>
    %17 = arith.mulf %16, %16 : vector<32x288xf32>
    %cst_14 = arith.constant dense<0.000000e+00> : vector<32xf32>
    %18 = vector.multi_reduction <add>, %17, %cst_14 [1] : vector<32x288xf32> to vector<32xf32>
    %19 = vector.shape_cast %18 : vector<32xf32> to vector<32x1xf32>
    %cst_15 = arith.constant 9.99999993E-9 : f32
    %20 = vector.broadcast %cst_15 : f32 to vector<32x1xf32>
    %21 = arith.addf %19, %20 : vector<32x1xf32>
    %22 = math.rsqrt %21 : vector<32x1xf32>
    %cst_16 = arith.constant 1.41421354 : f32
    %23 = vector.broadcast %cst_16 : f32 to vector<32x1xf32>
    %24 = arith.mulf %22, %23 : vector<32x1xf32>
    %25 = vector.broadcast %24 : vector<32x1xf32> to vector<32x288xf32>
    %26 = arith.mulf %16, %25 : vector<32x288xf32>
    %cst_17 = arith.constant dense<0.000000e+00> : vector<32x256xf32>
    %27 = tpu.matmul %26, %6, %cst_17 {dimension_numbers = #tpu.dot_dimension_numbers<[1], [0], [0], [1], [0, 0, 1, 1], [], []>} : vector<32x288xf32>, vector<288x256xf32>, vector<32x256xf32> -> vector<32x256xf32>
    %28 = vector.broadcast %5 : vector<1x256xf32> to vector<32x256xf32>
    %29 = arith.addf %27, %28 : vector<32x256xf32>
    %30 = vector.broadcast %2 : vector<32x1xf32> to vector<32x256xf32>
    %31 = arith.addf %29, %30 : vector<32x256xf32>
    %cst_18 = arith.constant 2.000000e-01 : f32
    %32 = vector.broadcast %cst_18 : f32 to vector<32x256xf32>
    %33 = arith.mulf %32, %31 : vector<32x256xf32>
    %34 = arith.maximumf %31, %33 : vector<32x256xf32>
    %cst_19 = arith.constant -2.560000e+02 : f32
    %cst_20 = arith.constant 2.560000e+02 : f32
    %35 = vector.broadcast %cst_19 : f32 to vector<32x256xf32>
    %36 = arith.maximumf %35, %34 : vector<32x256xf32>
    %37 = vector.broadcast %cst_20 : f32 to vector<32x256xf32>
    %38 = arith.minimumf %37, %36 : vector<32x256xf32>
    %39 = vector.broadcast %13 : vector<1x32xf32> to vector<8x32xf32>
    %40 = arith.mulf %3, %39 : vector<8x32xf32>
    %cst_21 = arith.constant dense<0.000000e+00> : vector<8x256xf32>
    %41 = tpu.matmul %40, %38, %cst_21 {dimension_numbers = #tpu.dot_dimension_numbers<[1], [0], [0], [1], [0, 0, 1, 1], [], []>} : vector<8x32xf32>, vector<32x256xf32>, vector<8x256xf32> -> vector<8x256xf32>
    %42 = vector.broadcast %4 : vector<8x1xf32> to vector<8x256xf32>
    %43 = arith.addf %41, %42 : vector<8x256xf32>
    %cst_22 = arith.constant -2.560000e+02 : f32
    %cst_23 = arith.constant 2.560000e+02 : f32
    %44 = vector.broadcast %cst_22 : f32 to vector<8x256xf32>
    %45 = arith.maximumf %44, %43 : vector<8x256xf32>
    %46 = vector.broadcast %cst_23 : f32 to vector<8x256xf32>
    %47 = arith.minimumf %46, %45 : vector<8x256xf32>
    %48 = tpu.concatenate %38, %47 in 0 : vector<32x256xf32>, vector<8x256xf32> -> vector<40x256xf32>
    %c0_24 = arith.constant 0 : index
    %c0_25 = arith.constant 0 : index
    %c0_26 = arith.constant 0 : index
    %49 = vector.load %arg5[%c0_24, %c0_25, %c0_26] : memref<2x40x256xf32, #tpu.memory_space<vmem>>, vector<1x40x256xf32>
    %50 = vector.shape_cast %49 : vector<1x40x256xf32> to vector<40x256xf32>
    %51 = vector.shape_cast %48 : vector<40x256xf32> to vector<1x40x256xf32>
    tpu.vector_store %arg5[%c0_24, %c0_25, %c0_26], %51 {strides = array<i32>} : memref<2x40x256xf32, #tpu.memory_space<vmem>>, vector<1x40x256xf32>,
    %52 = vector.extract_strided_slice %11 {offsets = [1, 0], sizes = [1, 32], strides = [1, 1]} : vector<2x64xf32> to vector<1x32xf32>
    %53 = vector.extract_strided_slice %11 {offsets = [1, 32], sizes = [1, 32], strides = [1, 1]} : vector<2x64xf32> to vector<1x32xf32>
    %54 = tpu.concatenate %52, %52, %52, %52, %52, %52, %52, %52, %52 in 1 : vector<1x32xf32>, vector<1x32xf32>, vector<1x32xf32>, vector<1x32xf32>, vector<1x32xf32>, vector<1x32xf32>, vector<1x32xf32>, vector<1x32xf32>, vector<1x32xf32> -> vector<1x288xf32>
    %55 = vector.broadcast %54 : vector<1x288xf32> to vector<32x288xf32>
    %56 = arith.mulf %7, %55 : vector<32x288xf32>
    %57 = arith.mulf %56, %56 : vector<32x288xf32>
    %cst_27 = arith.constant dense<0.000000e+00> : vector<32xf32>
    %58 = vector.multi_reduction <add>, %57, %cst_27 [1] : vector<32x288xf32> to vector<32xf32>
    %59 = vector.shape_cast %58 : vector<32xf32> to vector<32x1xf32>
    %cst_28 = arith.constant 9.99999993E-9 : f32
    %60 = vector.broadcast %cst_28 : f32 to vector<32x1xf32>
    %61 = arith.addf %59, %60 : vector<32x1xf32>
    %62 = math.rsqrt %61 : vector<32x1xf32>
    %cst_29 = arith.constant 1.41421354 : f32
    %63 = vector.broadcast %cst_29 : f32 to vector<32x1xf32>
    %64 = arith.mulf %62, %63 : vector<32x1xf32>
    %65 = vector.broadcast %64 : vector<32x1xf32> to vector<32x288xf32>
    %66 = arith.mulf %56, %65 : vector<32x288xf32>
    %cst_30 = arith.constant dense<0.000000e+00> : vector<32x256xf32>
    %67 = tpu.matmul %66, %6, %cst_30 {dimension_numbers = #tpu.dot_dimension_numbers<[1], [0], [0], [1], [0, 0, 1, 1], [], []>} : vector<32x288xf32>, vector<288x256xf32>, vector<32x256xf32> -> vector<32x256xf32>
    %68 = vector.broadcast %5 : vector<1x256xf32> to vector<32x256xf32>
    %69 = arith.addf %67, %68 : vector<32x256xf32>
    %70 = vector.broadcast %2 : vector<32x1xf32> to vector<32x256xf32>
    %71 = arith.addf %69, %70 : vector<32x256xf32>
    %cst_31 = arith.constant 2.000000e-01 : f32
    %72 = vector.broadcast %cst_31 : f32 to vector<32x256xf32>
    %73 = arith.mulf %72, %71 : vector<32x256xf32>
    %74 = arith.maximumf %71, %73 : vector<32x256xf32>
    %cst_32 = arith.constant -2.560000e+02 : f32
    %cst_33 = arith.constant 2.560000e+02 : f32
    %75 = vector.broadcast %cst_32 : f32 to vector<32x256xf32>
    %76 = arith.maximumf %75, %74 : vector<32x256xf32>
    %77 = vector.broadcast %cst_33 : f32 to vector<32x256xf32>
    %78 = arith.minimumf %77, %76 : vector<32x256xf32>
    %79 = vector.broadcast %53 : vector<1x32xf32> to vector<8x32xf32>
    %80 = arith.mulf %3, %79 : vector<8x32xf32>
    %cst_34 = arith.constant dense<0.000000e+00> : vector<8x256xf32>
    %81 = tpu.matmul %80, %78, %cst_34 {dimension_numbers = #tpu.dot_dimension_numbers<[1], [0], [0], [1], [0, 0, 1, 1], [], []>} : vector<8x32xf32>, vector<32x256xf32>, vector<8x256xf32> -> vector<8x256xf32>
    %82 = vector.broadcast %4 : vector<8x1xf32> to vector<8x256xf32>
    %83 = arith.addf %81, %82 : vector<8x256xf32>
    %cst_35 = arith.constant -2.560000e+02 : f32
    %cst_36 = arith.constant 2.560000e+02 : f32
    %84 = vector.broadcast %cst_35 : f32 to vector<8x256xf32>
    %85 = arith.maximumf %84, %83 : vector<8x256xf32>
    %86 = vector.broadcast %cst_36 : f32 to vector<8x256xf32>
    %87 = arith.minimumf %86, %85 : vector<8x256xf32>
    %88 = tpu.concatenate %78, %87 in 0 : vector<32x256xf32>, vector<8x256xf32> -> vector<40x256xf32>
    %c1 = arith.constant 1 : index
    %c0_37 = arith.constant 0 : index
    %c0_38 = arith.constant 0 : index
    %89 = vector.load %arg5[%c1, %c0_37, %c0_38] : memref<2x40x256xf32, #tpu.memory_space<vmem>>, vector<1x40x256xf32>
    %90 = vector.shape_cast %89 : vector<1x40x256xf32> to vector<40x256xf32>
    %91 = vector.shape_cast %88 : vector<40x256xf32> to vector<1x40x256xf32>
    tpu.vector_store %arg5[%c1, %c0_37, %c0_38], %91 {strides = array<i32>} : memref<2x40x256xf32, #tpu.memory_space<vmem>>, vector<1x40x256xf32>,
    return
  }
  func.func @transform_0(%arg0: i32) -> (i32, i32) {
    %c0_i32 = arith.constant 0 : i32
    %c0_i32_0 = arith.constant 0 : i32
    %c0_i32_1 = arith.constant 0 : i32
    return %c0_i32, %c0_i32_0 : i32, i32
  }
  func.func @transform_1(%arg0: i32) -> (i32, i32) {
    %c0_i32 = arith.constant 0 : i32
    %c0_i32_0 = arith.constant 0 : i32
    %c0_i32_1 = arith.constant 0 : i32
    return %c0_i32, %c0_i32_0 : i32, i32
  }
  func.func @transform_2(%arg0: i32) -> (i32, i32) {
    %c0_i32 = arith.constant 0 : i32
    %c0_i32_0 = arith.constant 0 : i32
    %c0_i32_1 = arith.constant 0 : i32
    return %c0_i32, %c0_i32_0 : i32, i32
  }
  func.func @transform_3(%arg0: i32) -> (i32, i32) {
    %c0_i32 = arith.constant 0 : i32
    %c0_i32_0 = arith.constant 0 : i32
    %c0_i32_1 = arith.constant 0 : i32
    return %c0_i32, %c0_i32_0 : i32, i32
  }
  func.func @transform_4(%arg0: i32) -> (i32, i32, i32) {
    %c0_i32 = arith.constant 0 : i32
    %c0_i32_0 = arith.constant 0 : i32
    %c0_i32_1 = arith.constant 0 : i32
    %c0_i32_2 = arith.constant 0 : i32
    return %c0_i32, %c0_i32_0, %c0_i32_1 : i32, i32, i32
  }
}

</mosaic_0001>

<llo_original>
// kernel: ada_synthesis_block_forward.1
$region0: #{ada_synthesis_block_forward.1}
  #allocation0 [shape = 'u32[]', space=smem, size = 0x4, offset = 0x4, fixed_abs, tag = 'smem constant byte address 0x4 - core index']
  #allocation1 [shape = 'u32[144,128]{1,0:T(1,128)}', space=vmem, size = 0x12000, scoped, tag = 'internal scratch']
  %s0 = inlined_call_operand.vmem [shape: f32[2,64], index: 0, kind: input, shape index: {}]
  %s1 = inlined_call_operand.vmem [shape: f32[288,256], index: 1, kind: input, shape index: {}]
  %s2 = inlined_call_operand.vmem [shape: f32[32,288], index: 2, kind: input, shape index: {}]
  %s3 = inlined_call_operand.vmem [shape: f32[80,256], index: 3, kind: input, shape index: {}]
  %s4 = inlined_call_operand.vmem [shape: f32[2,40,256], index: 4, kind: output, shape index: {}]
  %s5 = sld [smem:[#allocation0]]
  $region26: #{ada_synthesis_block_forward.1} parent=0
    _
  %s7 = ssub.s32 1, %s5
  %s8 = scalar_select 0, %s7, %s5
  // Predicated region
  $region2: #{ada_synthesis_block_forward.1} parent=0 // pred_check
    _
  $region3: #{ada_synthesis_block_forward.1} parent=0 // pred_check_branch
    %10 = sbr.rel (0) target = $region5
  $region4: #{ada_synthesis_block_forward.1} parent=0 // pred_region
    _
  $region5: #{ada_synthesis_block_forward.1} parent=0 // pred_fallthru
    _
  // Predicated region
  $region6: #{ada_synthesis_block_forward.1} parent=0 // pred_check
    _
  $region7: #{ada_synthesis_block_forward.1} parent=0 // pred_check_branch
    %12 = sbr.rel (0) target = $region9
  $region8: #{ada_synthesis_block_forward.1} parent=0 // pred_region
    _
  $region9: #{ada_synthesis_block_forward.1} parent=0 // pred_fallthru
    _
  // Predicated region
  $region10: #{ada_synthesis_block_forward.1} parent=0 // pred_check
    _
  $region11: #{ada_synthesis_block_forward.1} parent=0 // pred_check_branch
    %14 = sbr.rel (0) target = $region13
  $region12: #{ada_synthesis_block_forward.1} parent=0 // pred_region
    _
  $region13: #{ada_synthesis_block_forward.1} parent=0 // pred_fallthru
    _
  // Predicated region
  $region14: #{ada_synthesis_block_forward.1} parent=0 // pred_check
    _
  $region15: #{ada_synthesis_block_forward.1} parent=0 // pred_check_branch
    %16 = sbr.rel (0) target = $region17
  $region16: #{ada_synthesis_block_forward.1} parent=0 // pred_region
    _
  $region17: #{ada_synthesis_block_forward.1} parent=0 // pred_fallthru
    _
  %v17 = vld [vmem:[%s3] sm:$0xff]
  %v18 = vld [vmem:[%s3 + $0x10] sm:$0xff]
  %v19 = vld [vmem:[%s3 + $0x20] sm:$0xff]
  %v20 = vld [vmem:[%s3 + $0x30] sm:$0xff]
  %v21 = vld [vmem:[%s3 + $0x40] sm:$0xff]
  %v22 = vld [vmem:[%s3 + $0x50] sm:$0xff]
  %v23 = vld [vmem:[%s3 + $0x60] sm:$0xff]
  %v24 = vld [vmem:[%s3 + $0x70] sm:$0xff]
  %v25 = vld [vmem:[%s3 + $0x80] ss:$0 sm:$0xff]
  %v26 = vld [vmem:[%s3 + $0x80] sm:$0xff]
  %s27 = scalar_lea.vmem %s3, 144
  %v28 = vld [vmem:[%s27] ss:$8 sm:$0x3]
  %v29 = vld [vmem:[%s1] sm:$0xff]
  %v30 = vld [vmem:[%s1 + $0x8] sm:$0xff]
  %v31 = vld [vmem:[%s1 + $0x10] sm:$0xff]
  %v32 = vld [vmem:[%s1 + $0x18] sm:$0xff]
  %v33 = vld [vmem:[%s1 + $0x20] sm:$0xff]
  %v34 = vld [vmem:[%s1 + $0x28] sm:$0xff]
  %v35 = vld [vmem:[%s1 + $0x30] sm:$0xff]
  %v36 = vld [vmem:[%s1 + $0x38] sm:$0xff]
  %v37 = vld [vmem:[%s1 + $0x40] sm:$0xff]
  %v38 = vld [vmem:[%s1 + $0x48] sm:$0xff]
  %v39 = vld [vmem:[%s1 + $0x50] sm:$0xff]
  %v40 = vld [vmem:[%s1 + $0x58] sm:$0xff]
  %v41 = vld [vmem:[%s1 + $0x60] sm:$0xff]
  %v42 = vld [vmem:[%s1 + $0x68] sm:$0xff]
  %v43 = vld [vmem:[%s1 + $0x70] sm:$0xff]
  %v44 = vld [vmem:[%s1 + $0x78] sm:$0xff]
  %v45 = vld [vmem:[%s1 + $0x80] sm:$0xff]
  %v46 = vld [vmem:[%s1 + $0x88] sm:$0xff]
  %v47 = vld [vmem:[%s1 + $0x90] sm:$0xff]
  %v48 = vld [vmem:[%s1 + $0x98] sm:$0xff]
  %v49 = vld [vmem:[%s1 + $0xa0] sm:$0xff]
  %v50 = vld [vmem:[%s1 + $0xa8] sm:$0xff]
  %v51 = vld [vmem:[%s1 + $0xb0] sm:$0xff]
  %v52 = vld [vmem:[%s1 + $0xb8] sm:$0xff]
  %v53 = vld [vmem:[%s1 + $0xc0] sm:$0xff]
  %v54 = vld [vmem:[%s1 + $0xc8] sm:$0xff]
  %v55 = vld [vmem:[%s1 + $0xd0] sm:$0xff]
  %v56 = vld [vmem:[%s1 + $0xd8] sm:$0xff]
  %v57 = vld [vmem:[%s1 + $0xe0] sm:$0xff]
  %v58 = vld [vmem:[%s1 + $0xe8] sm:$0xff]
  %v59 = vld [vmem:[%s1 + $0xf0] sm:$0xff]
  %v60 = vld [vmem:[%s1 + $0xf8] sm:$0xff]
  %v61 = vld [vmem:[%s1 + $0x100] sm:$0xff]
  %v62 = vld [vmem:[%s1 + $0x108] sm:$0xff]
  %v63 = vld [vmem:[%s1 + $0x110] sm:$0xff]
  %v64 = vld [vmem:[%s1 + $0x118] sm:$0xff]
  %v65 = vld [vmem:[%s1 + $0x120] sm:$0xff]
  %v66 = vld [vmem:[%s1 + $0x128] sm:$0xff]
  %v67 = vld [vmem:[%s1 + $0x130] sm:$0xff]
  %v68 = vld [vmem:[%s1 + $0x138] sm:$0xff]
  %v69 = vld [vmem:[%s1 + $0x140] sm:$0xff]
  %v70 = vld [vmem:[%s1 + $0x148] sm:$0xff]
  %v71 = vld [vmem:[%s1 + $0x150] sm:$0xff]
  %v72 = vld [vmem:[%s1 + $0x158] sm:$0xff]
  %v73 = vld [vmem:[%s1 + $0x160] sm:$0xff]
  %v74 = vld [vmem:[%s1 + $0x168] sm:$0xff]
  %v75 = vld [vmem:[%s1 + $0x170] sm:$0xff]
  %v76 = vld [vmem:[%s1 + $0x178] sm:$0xff]
  %v77 = vld [vmem:[%s1 + $0x180] sm:$0xff]
  %v78 = vld [vmem:[%s1 + $0x188] sm:$0xff]
  %v79 = vld [vmem:[%s1 + $0x190] sm:$0xff]
  %v80 = vld [vmem:[%s1 + $0x198] sm:$0xff]
  %v81 = vld [vmem:[%s1 + $0x1a0] sm:$0xff]
  %v82 = vld [vmem:[%s1 + $0x1a8] sm:$0xff]
  %v83 = vld [vmem:[%s1 + $0x1b0] sm:$0xff]
  %v84 = vld [vmem:[%s1 + $0x1b8] sm:$0xff]
  %v85 = vld [vmem:[%s1 + $0x1c0] sm:$0xff]
  %v86 = vld [vmem:[%s1 + $0x1c8] sm:$0xff]
  %v87 = vld [vmem:[%s1 + $0x1d0] sm:$0xff]
  %v88 = vld [vmem:[%s1 + $0x1d8] sm:$0xff]
  %v89 = vld [vmem:[%s1 + $0x1e0] sm:$0xff]
  %v90 = vld [vmem:[%s1 + $0x1e8] sm:$0xff]
  %v91 = vld [vmem:[%s1 + $0x1f0] sm:$0xff]
  %v92 = vld [vmem:[%s1 + $0x1f8] sm:$0xff]
  %v93 = vld [vmem:[%s1 + $0x200] sm:$0xff]
  %v94 = vld [vmem:[%s1 + $0x208] sm:$0xff]
  %v95 = vld [vmem:[%s1 + $0x210] sm:$0xff]
  %v96 = vld [vmem:[%s1 + $0x218] sm:$0xff]
  %v97 = vld [vmem:[%s1 + $0x220] sm:$0xff]
  %v98 = vld [vmem:[%s1 + $0x228] sm:$0xff]
  %v99 = vld [vmem:[%s1 + $0x230] sm:$0xff]
  %v100 = vld [vmem:[%s1 + $0x238] sm:$0xff]
  %v101 = vld [vmem:[%s2] sm:$0xff]
  %v102 = vld [vmem:[%s2 + $0x8] sm:$0xff]
  %v103 = vld [vmem:[%s2 + $0x10] sm:$0xff]
  %v104 = vld [vmem:[%s2 + $0x18] sm:$0xff]
  %v105 = vld [vmem:[%s2 + $0x20] sm:$0xff]
  %v106 = vld [vmem:[%s2 + $0x28] sm:$0xff]
  %v107 = vld [vmem:[%s2 + $0x30] sm:$0xff]
  %v108 = vld [vmem:[%s2 + $0x38] sm:$0xff]
  %v109 = vld [vmem:[%s2 + $0x40] sm:$0xff]
  %v110 = vld [vmem:[%s2 + $0x48] sm:$0xff]
  %v111 = vld [vmem:[%s2 + $0x50] sm:$0xff]
  %v112 = vld [vmem:[%s2 + $0x58] sm:$0xff]
  %v113 = vld [vmem:[%s0] sm:$0x3]
  %vm114 = vcmask 523264
  %v116 = vsel %vm114, %v113, 0
  %118 = vmatprep.subr.mxu0 0.0
  %119 = vmatpush1.msra.mxu0 %v17
  %120 = vmatprep.subr.mxu0 0.0
  %121 = vmatpush1.msra.mxu0 %v18
  %122 = vmatprep.subr.mxu0 0.0
  %123 = vmatpush1.msra.mxu0 %v19
  %124 = vmatprep.subr.mxu0 0.0
  %125 = vmatpush1.msra.mxu0 %v20
  %126 = vmatprep.subr.mxu0 0.0
  %127 = vmatpush1.msra.mxu0 %v21
  %128 = vmatprep.subr.mxu0 0.0
  %129 = vmatpush1.msra.mxu0 %v22
  %130 = vmatprep.subr.mxu0 0.0
  %131 = vmatpush1.msra.mxu0 %v23
  %132 = vmatprep.subr.mxu0 0.0
  %133 = vmatpush1.msra.mxu0 %v24
  %134 = vmatprep.subr.mxu0 0.0
  %135 = vmatpush1.msra.mxu0 0.0
  %136 = vmatprep.subr.mxu0 0.0
  %137 = vmatpush1.msra.mxu0 0.0
  %138 = vmatprep.subr.mxu0 0.0
  %139 = vmatpush1.msra.mxu0 0.0
  %140 = vmatprep.subr.mxu0 0.0
  %141 = vmatpush1.msra.mxu0 0.0
  %142 = vmatprep.subr.mxu0 0.0
  %143 = vmatpush1.msra.mxu0 0.0
  %144 = vmatprep.subr.mxu0 0.0
  %145 = vmatpush1.msra.mxu0 0.0
  %146 = vmatprep.subr.mxu0 0.0
  %147 = vmatpush1.msra.mxu0 0.0
  %148 = vmatprep.subr.mxu0 0.0
  %149 = vmatpush1.msra.mxu0 0.0
  %150 = vmatprep.subr.mxu0 0.0
  %151 = vmatpush1.msra.mxu0 0.0
  %152 = vmatprep.subr.mxu0 0.0
  %153 = vmatpush1.msra.mxu0 0.0
  %154 = vmatprep.subr.mxu0 0.0
  %155 = vmatpush1.msra.mxu0 0.0
  %156 = vmatprep.subr.mxu0 0.0
  %157 = vmatpush1.msra.mxu0 0.0
  %158 = vmatprep.subr.mxu0 0.0
  %159 = vmatpush1.msra.mxu0 0.0
  %160 = vmatprep.subr.mxu0 0.0
  %161 = vmatpush1.msra.mxu0 0.0
  %162 = vmatprep.subr.mxu0 0.0
  %163 = vmatpush1.msra.mxu0 0.0
  %164 = vmatprep.subr.mxu0 0.0
  %165 = vmatpush1.msra.mxu0 0.0
  %166 = vmatprep.subr.mxu0 0.0
  %167 = vmatpush1.msra.mxu0 0.0
  %168 = vmatprep.subr.mxu0 0.0
  %169 = vmatpush1.msra.mxu0 0.0
  %170 = vmatprep.subr.mxu0 0.0
  %171 = vmatpush1.msra.mxu0 0.0
  %172 = vmatprep.subr.mxu0 0.0
  %173 = vmatpush1.msra.mxu0 0.0
  %174 = vmatprep.subr.mxu0 0.0
  %175 = vmatpush1.msra.mxu0 0.0
  %176 = vmatprep.subr.mxu0 0.0
  %177 = vmatpush1.msra.mxu0 0.0
  %178 = vmatprep.subr.mxu0 0.0
  %179 = vmatpush1.msra.mxu0 0.0
  %180 = vmatprep.subr.mxu0 0.0
  %181 = vmatpush1.msra.mxu0 0.0
  %182 = vmatprep.mubr.f32.mxu0 0.0
  %183 = vmatmul.mubr.f32.gmra.mrb[0].mxu0 %v116
  %v184 = vpop.f32.mrb[0].mxu0
  %v185 = vadd.f32 %v25, %v184
  %v186 = vpop.f32.mrb[0].mxu0
  %187 = vdwg.mxu0
  %189 = vrot.lane.b32.xlu0 %v185, 32
  %v190 = vpop.permute.xlu0 %189
  %192 = vrot.lane.b32.xlu0 %v185, 64
  %v193 = vpop.permute.xlu0 %192
  %195 = vrot.lane.b32.xlu0 %v185, 96
  %v196 = vpop.permute.xlu0 %195
  %vm198 = vcmask 261120
  %v199 = vsel %vm198, %v185, %v190
  %v200 = vsel %vm114, %v199, %v193
  %vm201 = vcmask 785408
  %v202 = vsel %vm201, %v200, %v196
  %v203 = vlaneseq
  %v204 = vshrl.u32 %v203, 7
  %v205 = vsub.s32 0, %v204
  %v206 = vrot.slane %v202, %v205
  %v207 = vlaneseq
  %v208 = vshrl.u32 %v207, 7
  %v209 = vsub.s32 0, %v208
  %v210 = vrot.slane %v185, %v209
  %v211 = vmul.f32 %v101, %v206
  %v212 = vmul.f32 %v102, %v206
  %v213 = vmul.f32 %v103, %v210
  %v214 = vmul.f32 %v104, %v206
  %v215 = vmul.f32 %v105, %v206
  %v216 = vmul.f32 %v106, %v210
  %v217 = vmul.f32 %v107, %v206
  %v218 = vmul.f32 %v108, %v206
  %v219 = vmul.f32 %v109, %v210
  %v220 = vmul.f32 %v110, %v206
  %v221 = vmul.f32 %v111, %v206
  %v222 = vmul.f32 %v112, %v210
  %v223 = vmul.f32 %v211, %v211
  %v224 = vmul.f32 %v212, %v212
  %v225 = vmul.f32 %v213, %v213
  %v226 = vmul.f32 %v214, %v214
  %v227 = vmul.f32 %v215, %v215
  %v228 = vmul.f32 %v216, %v216
  %v229 = vmul.f32 %v217, %v217
  %v230 = vmul.f32 %v218, %v218
  %v231 = vmul.f32 %v219, %v219
  %v232 = vmul.f32 %v220, %v220
  %v233 = vmul.f32 %v221, %v221
  %v234 = vmul.f32 %v222, %v222
  %v235 = vadd.f32 %v223, %v224
  %v236 = vsel %vm198, %v225, 0.0
  %v237 = vadd.f32 %v235, %v236
  %238 = vadd.xlane.f32.xlu0 %v237
  %v239 = vpop.xlane.xlu0 %238
  %v240 = vadd.f32 %v226, %v227
  %v241 = vsel %vm198, %v228, 0.0
  %v242 = vadd.f32 %v240, %v241
  %243 = vadd.xlane.f32.xlu0 %v242
  %v244 = vpop.xlane.xlu0 %243
  %v245 = vadd.f32 %v229, %v230
  %v246 = vsel %vm198, %v231, 0.0
  %v247 = vadd.f32 %v245, %v246
  %248 = vadd.xlane.f32.xlu0 %v247
  %v249 = vpop.xlane.xlu0 %248
  %v250 = vadd.f32 %v232, %v233
  %v251 = vsel %vm198, %v234, 0.0
  %v252 = vadd.f32 %v250, %v251
  %253 = vadd.xlane.f32.xlu0 %v252
  %v254 = vpop.xlane.xlu0 %253
  %v255 = vadd.f32 %v239, 1e-08
  %v256 = vadd.f32 %v244, 1e-08
  %v257 = vadd.f32 %v249, 1e-08
  %v258 = vadd.f32 %v254, 1e-08
  %v259 = vrsqrt.pop %v255
  %v260 = vrsqrt.pop %v256
  %v261 = vrsqrt.pop %v257
  %v262 = vrsqrt.pop %v258
  %v263 = vmul.f32 %v259, 1.4142135
  %v264 = vmul.f32 %v260, 1.4142135
  %v265 = vmul.f32 %v261, 1.4142135
  %v266 = vmul.f32 %v262, 1.4142135
  %v267 = vmul.f32 %v211, %v263
  %v268 = vmul.f32 %v212, %v263
  %v269 = vmul.f32 %v213, %v263
  %v270 = vmul.f32 %v214, %v264
  %v271 = vmul.f32 %v215, %v264
  %v272 = vmul.f32 %v216, %v264
  %v273 = vmul.f32 %v217, %v265
  %v274 = vmul.f32 %v218, %v265
  %v275 = vmul.f32 %v219, %v265
  %v276 = vmul.f32 %v220, %v266
  %v277 = vmul.f32 %v221, %v266
  %v278 = vmul.f32 %v222, %v266
  %v280 = vlaneseq
  %v281 = vshrl.u32 %v280, 7
  %v282 = vsub.s32 0, %v281
  %v283 = vrot.slane %v28, %v282
  %v284 = vlaneseq
  %v285 = vshrl.u32 %v284, 7
  %v286 = vsub.s32 1, %v285
  %v287 = vrot.slane %v28, %v286
  %v291 = vsel %vm198, %v269, 0
  %v294 = vsel %vm198, %v272, 0
  %v297 = vsel %vm198, %v275, 0
  %v300 = vsel %vm198, %v278, 0
  %302 = vmatprep.subr.mxu0 %v30
  %303 = vmatpush1.msra.mxu0 %v29
  %304 = vmatprep.subr.mxu0 %v32
  %305 = vmatpush1.msra.mxu0 %v31
  %306 = vmatprep.subr.mxu0 %v34
  %307 = vmatpush1.msra.mxu0 %v33
  %308 = vmatprep.subr.mxu0 %v36
  %309 = vmatpush1.msra.mxu0 %v35
  %310 = vmatprep.subr.mxu0 %v38
  %311 = vmatpush1.msra.mxu0 %v37
  %312 = vmatprep.subr.mxu0 %v40
  %313 = vmatpush1.msra.mxu0 %v39
  %314 = vmatprep.subr.mxu0 %v42
  %315 = vmatpush1.msra.mxu0 %v41
  %316 = vmatprep.subr.mxu0 %v44
  %317 = vmatpush1.msra.mxu0 %v43
  %318 = vmatprep.subr.mxu0 %v46
  %319 = vmatpush1.msra.mxu0 %v45
  %320 = vmatprep.subr.mxu0 %v48
  %321 = vmatpush1.msra.mxu0 %v47
  %322 = vmatprep.subr.mxu0 %v50
  %323 = vmatpush1.msra.mxu0 %v49
  %324 = vmatprep.subr.mxu0 %v52
  %325 = vmatpush1.msra.mxu0 %v51
  %326 = vmatprep.subr.mxu0 %v54
  %327 = vmatpush1.msra.mxu0 %v53
  %328 = vmatprep.subr.mxu0 %v56
  %329 = vmatpush1.msra.mxu0 %v55
  %330 = vmatprep.subr.mxu0 %v58
  %331 = vmatpush1.msra.mxu0 %v57
  %332 = vmatprep.subr.mxu0 %v60
  %333 = vmatpush1.msra.mxu0 %v59
  %334 = vmatprep.subr.mxu0 %v62
  %335 = vmatpush1.msra.mxu0 %v61
  %336 = vmatprep.subr.mxu0 %v64
  %337 = vmatpush1.msra.mxu0 %v63
  %338 = vmatprep.subr.mxu0 %v66
  %339 = vmatpush1.msra.mxu0 %v65
  %340 = vmatprep.subr.mxu0 %v68
  %341 = vmatpush1.msra.mxu0 %v67
  %342 = vmatprep.subr.mxu0 %v70
  %343 = vmatpush1.msra.mxu0 %v69
  %344 = vmatprep.subr.mxu0 %v72
  %345 = vmatpush1.msra.mxu0 %v71
  %346 = vmatprep.subr.mxu0 %v74
  %347 = vmatpush1.msra.mxu0 %v73
  %348 = vmatprep.subr.mxu0 %v76
  %349 = vmatpush1.msra.mxu0 %v75
  %350 = vmatprep.subr.mxu0 %v78
  %351 = vmatpush1.msra.mxu0 %v77
  %352 = vmatprep.subr.mxu0 %v80
  %353 = vmatpush1.msra.mxu0 %v79
  %354 = vmatprep.subr.mxu0 %v82
  %355 = vmatpush1.msra.mxu0 %v81
  %356 = vmatprep.subr.mxu0 %v84
  %357 = vmatpush1.msra.mxu0 %v83
  %358 = vmatprep.subr.mxu0 %v86
  %359 = vmatpush1.msra.mxu0 %v85
  %360 = vmatprep.subr.mxu0 %v88
  %361 = vmatpush1.msra.mxu0 %v87
  %362 = vmatprep.subr.mxu0 %v90
  %363 = vmatpush1.msra.mxu0 %v89
  %364 = vmatprep.subr.mxu0 %v92
  %365 = vmatpush1.msra.mxu0 %v91
  %366 = vmatprep.mubr.f32.mxu0 %v268
  %367 = vmatmul.mubr.f32.gmra.mrb[0].mxu0 %v267
  %v368 = vpop.f32.mrb[0].mxu0
  %v369 = vadd.f32 %v283, %v368
  %v370 = vpop.f32.mrb[0].mxu0
  %v371 = vadd.f32 %v287, %v370
  %372 = vmatprep.mubr.f32.mxu0 %v271
  %373 = vmatmul.mubr.f32.gmra.mrb[0].mxu0 %v270
  %v374 = vpop.f32.mrb[0].mxu0
  %v375 = vadd.f32 %v283, %v374
  %v376 = vpop.f32.mrb[0].mxu0
  %v377 = vadd.f32 %v287, %v376
  %378 = vmatprep.mubr.f32.mxu0 %v274
  %379 = vmatmul.mubr.f32.gmra.mrb[0].mxu0 %v273
  %v380 = vpop.f32.mrb[0].mxu0
  %v381 = vadd.f32 %v283, %v380
  %v382 = vpop.f32.mrb[0].mxu0
  %v383 = vadd.f32 %v287, %v382
  %384 = vmatprep.mubr.f32.mxu0 %v277
  %385 = vmatmul.mubr.f32.gmra.mrb[0].mxu0 %v276
  %v386 = vpop.f32.mrb[0].mxu0
  %v387 = vadd.f32 %v283, %v386
  %v388 = vpop.f32.mrb[0].mxu0
  %v389 = vadd.f32 %v287, %v388
  %390 = vdwg.mxu0
  %391 = vmatprep.subr.mxu0 %v94
  %392 = vmatpush1.msra.mxu0 %v93
  %393 = vmatprep.subr.mxu0 %v96
  %394 = vmatpush1.msra.mxu0 %v95
  %395 = vmatprep.subr.mxu0 %v98
  %396 = vmatpush1.msra.mxu0 %v97
  %397 = vmatprep.subr.mxu0 %v100
  %398 = vmatpush1.msra.mxu0 %v99
  %399 = vmatprep.subr.mxu0 0.0
  %400 = vmatpush1.msra.mxu0 0.0
  %401 = vmatprep.subr.mxu0 0.0
  %402 = vmatpush1.msra.mxu0 0.0
  %403 = vmatprep.subr.mxu0 0.0
  %404 = vmatpush1.msra.mxu0 0.0
  %405 = vmatprep.subr.mxu0 0.0
  %406 = vmatpush1.msra.mxu0 0.0
  %407 = vmatprep.subr.mxu0 0.0
  %408 = vmatpush1.msra.mxu0 0.0
  %409 = vmatprep.subr.mxu0 0.0
  %410 = vmatpush1.msra.mxu0 0.0
  %411 = vmatprep.subr.mxu0 0.0
  %412 = vmatpush1.msra.mxu0 0.0
  %413 = vmatprep.subr.mxu0 0.0
  %414 = vmatpush1.msra.mxu0 0.0
  %415 = vmatprep.subr.mxu0 0.0
  %416 = vmatpush1.msra.mxu0 0.0
  %417 = vmatprep.subr.mxu0 0.0
  %418 = vmatpush1.msra.mxu0 0.0
  %419 = vmatprep.subr.mxu0 0.0
  %420 = vmatpush1.msra.mxu0 0.0
  %421 = vmatprep.subr.mxu0 0.0
  %422 = vmatpush1.msra.mxu0 0.0
  %423 = vmatprep.subr.mxu0 0.0
  %424 = vmatpush1.msra.mxu0 0.0
  %425 = vmatprep.subr.mxu0 0.0
  %426 = vmatpush1.msra.mxu0 0.0
  %427 = vmatprep.subr.mxu0 0.0
  %428 = vmatpush1.msra.mxu0 0.0
  %429 = vmatprep.subr.mxu0 0.0
  %430 = vmatpush1.msra.mxu0 0.0
  %431 = vmatprep.subr.mxu0 0.0
  %432 = vmatpush1.msra.mxu0 0.0
  %433 = vmatprep.subr.mxu0 0.0
  %434 = vmatpush1.msra.mxu0 0.0
  %435 = vmatprep.subr.mxu0 0.0
  %436 = vmatpush1.msra.mxu0 0.0
  %437 = vmatprep.subr.mxu0 0.0
  %438 = vmatpush1.msra.mxu0 0.0
  %439 = vmatprep.subr.mxu0 0.0
  %440 = vmatpush1.msra.mxu0 0.0
  %441 = vmatprep.subr.mxu0 0.0
  %442 = vmatpush1.msra.mxu0 0.0
  %443 = vmatprep.subr.mxu0 0.0
  %444 = vmatpush1.msra.mxu0 0.0
  %445 = vmatprep.subr.mxu0 0.0
  %446 = vmatpush1.msra.mxu0 0.0
  %447 = vmatprep.subr.mxu0 0.0
  %448 = vmatpush1.msra.mxu0 0.0
  %449 = vmatprep.subr.mxu0 0.0
  %450 = vmatpush1.msra.mxu0 0.0
  %451 = vmatprep.subr.mxu0 0.0
  %452 = vmatpush1.msra.mxu0 0.0
  %453 = vmatprep.subr.mxu0 0.0
  %454 = vmatpush1.msra.mxu0 0.0
  %455 = vmatprep.mubr.f32.mxu0 0.0
  %456 = vmatmul.mubr.f32.gmra.mrb[0].mxu0 %v291
  %v457 = vpop.f32.mrb[0].mxu0
  %v458 = vadd.f32 %v369, %v457
  %v459 = vpop.f32.mrb[0].mxu0
  %v460 = vadd.f32 %v371, %v459
  %461 = vmatprep.mubr.f32.mxu0 0.0
  %462 = vmatmul.mubr.f32.gmra.mrb[0].mxu0 %v294
  %v463 = vpop.f32.mrb[0].mxu0
  %v464 = vadd.f32 %v375, %v463
  %v465 = vpop.f32.mrb[0].mxu0
  %v466 = vadd.f32 %v377, %v465
  %467 = vmatprep.mubr.f32.mxu0 0.0
  %468 = vmatmul.mubr.f32.gmra.mrb[0].mxu0 %v297
  %v469 = vpop.f32.mrb[0].mxu0
  %v470 = vadd.f32 %v381, %v469
  %v471 = vpop.f32.mrb[0].mxu0
  %v472 = vadd.f32 %v383, %v471
  %473 = vmatprep.mubr.f32.mxu0 0.0
  %474 = vmatmul.mubr.f32.gmra.mrb[0].mxu0 %v300
  %v475 = vpop.f32.mrb[0].mxu0
  %v476 = vadd.f32 %v387, %v475
  %v477 = vpop.f32.mrb[0].mxu0
  %v478 = vadd.f32 %v389, %v477
  %479 = vdwg.mxu0
  %481 = vset.pattern.permute.xlu0 64
  %482 = vperm.xlu0 %481, %v17
  %v483 = vpop.permute.xlu0 %482
  %486 = vset.pattern.permute.xlu0 64
  %487 = vperm.xlu0 %486, %v18
  %v488 = vpop.permute.xlu0 %487
  %491 = vset.pattern.permute.xlu0 64
  %492 = vperm.xlu0 %491, %v19
  %v493 = vpop.permute.xlu0 %492
  %496 = vset.pattern.permute.xlu0 64
  %497 = vperm.xlu0 %496, %v20
  %v498 = vpop.permute.xlu0 %497
  %v500 = vadd.f32 %v458, %v483
  %v501 = vadd.f32 %v460, %v483
  %v502 = vadd.f32 %v464, %v488
  %v503 = vadd.f32 %v466, %v488
  %v504 = vadd.f32 %v470, %v493
  %v505 = vadd.f32 %v472, %v493
  %v506 = vadd.f32 %v476, %v498
  %v507 = vadd.f32 %v478, %v498
  %v508 = vmul.f32 %v500, 0.2
  %v509 = vmul.f32 %v501, 0.2
  %v510 = vmul.f32 %v502, 0.2
  %v511 = vmul.f32 %v503, 0.2
  %v512 = vmul.f32 %v504, 0.2
  %v513 = vmul.f32 %v505, 0.2
  %v514 = vmul.f32 %v506, 0.2
  %v515 = vmul.f32 %v507, 0.2
  %v516 = vmax.f32 %v500, %v508
  %v517 = vmax.f32 %v501, %v509
  %v518 = vmax.f32 %v502, %v510
  %v519 = vmax.f32 %v503, %v511
  %v520 = vmax.f32 %v504, %v512
  %v521 = vmax.f32 %v505, %v513
  %v522 = vmax.f32 %v506, %v514
  %v523 = vmax.f32 %v507, %v515
  %v524 = vmax.f32 %v516, -256.0
  %v525 = vmax.f32 %v517, -256.0
  %v526 = vmax.f32 %v518, -256.0
  %v527 = vmax.f32 %v519, -256.0
  %v528 = vmax.f32 %v520, -256.0
  %v529 = vmax.f32 %v521, -256.0
  %v530 = vmax.f32 %v522, -256.0
  %v531 = vmax.f32 %v523, -256.0
  %v532 = vmin.f32 %v524, 256.0
  %v533 = vmin.f32 %v525, 256.0
  %v534 = vmin.f32 %v526, 256.0
  %v535 = vmin.f32 %v527, 256.0
  %v536 = vmin.f32 %v528, 256.0
  %v537 = vmin.f32 %v529, 256.0
  %v538 = vmin.f32 %v530, 256.0
  %v539 = vmin.f32 %v531, 256.0
  %541 = vrot.lane.b32.xlu0 %v210, 32
  %v542 = vpop.permute.xlu0 %541
  %v544 = vmul.f32 %v26, %v542
  %546 = vset.pattern.permute.xlu0 96
  %547 = vperm.xlu0 %546, %v26
  %v548 = vpop.permute.xlu0 %547
  %551 = vrot.lane.b32.xlu0 %v544, 64
  %v552 = vpop.permute.xlu0 %551
  %v553 = vsel %vm198, %v552, 0
  %555 = vmatprep.subr.mxu0 %v533
  %556 = vmatpush1.msra.mxu0 %v532
  %557 = vmatprep.subr.mxu0 %v535
  %558 = vmatpush1.msra.mxu0 %v534
  %559 = vmatprep.subr.mxu0 %v537
  %560 = vmatpush1.msra.mxu0 %v536
  %561 = vmatprep.subr.mxu0 %v539
  %562 = vmatpush1.msra.mxu0 %v538
  %563 = vmatprep.subr.mxu0 0.0
  %564 = vmatpush1.msra.mxu0 0.0
  %565 = vmatprep.subr.mxu0 0.0
  %566 = vmatpush1.msra.mxu0 0.0
  %567 = vmatprep.subr.mxu0 0.0
  %568 = vmatpush1.msra.mxu0 0.0
  %569 = vmatprep.subr.mxu0 0.0
  %570 = vmatpush1.msra.mxu0 0.0
  %571 = vmatprep.subr.mxu0 0.0
  %572 = vmatpush1.msra.mxu0 0.0
  %573 = vmatprep.subr.mxu0 0.0
  %574 = vmatpush1.msra.mxu0 0.0
  %575 = vmatprep.subr.mxu0 0.0
  %576 = vmatpush1.msra.mxu0 0.0
  %577 = vmatprep.subr.mxu0 0.0
  %578 = vmatpush1.msra.mxu0 0.0
  %579 = vmatprep.subr.mxu0 0.0
  %580 = vmatpush1.msra.mxu0 0.0
  %581 = vmatprep.subr.mxu0 0.0
  %582 = vmatpush1.msra.mxu0 0.0
  %583 = vmatprep.subr.mxu0 0.0
  %584 = vmatpush1.msra.mxu0 0.0
  %585 = vmatprep.subr.mxu0 0.0
  %586 = vmatpush1.msra.mxu0 0.0
  %587 = vmatprep.subr.mxu0 0.0
  %588 = vmatpush1.msra.mxu0 0.0
  %589 = vmatprep.subr.mxu0 0.0
  %590 = vmatpush1.msra.mxu0 0.0
  %591 = vmatprep.subr.mxu0 0.0
  %592 = vmatpush1.msra.mxu0 0.0
  %593 = vmatprep.subr.mxu0 0.0
  %594 = vmatpush1.msra.mxu0 0.0
  %595 = vmatprep.subr.mxu0 0.0
  %596 = vmatpush1.msra.mxu0 0.0
  %597 = vmatprep.subr.mxu0 0.0
  %598 = vmatpush1.msra.mxu0 0.0
  %599 = vmatprep.subr.mxu0 0.0
  %600 = vmatpush1.msra.mxu0 0.0
  %601 = vmatprep.subr.mxu0 0.0
  %602 = vmatpush1.msra.mxu0 0.0
  %603 = vmatprep.subr.mxu0 0.0
  %604 = vmatpush1.msra.mxu0 0.0
  %605 = vmatprep.subr.mxu0 0.0
  %606 = vmatpush1.msra.mxu0 0.0
  %607 = vmatprep.subr.mxu0 0.0
  %608 = vmatpush1.msra.mxu0 0.0
  %609 = vmatprep.subr.mxu0 0.0
  %610 = vmatpush1.msra.mxu0 0.0
  %611 = vmatprep.subr.mxu0 0.0
  %612 = vmatpush1.msra.mxu0 0.0
  %613 = vmatprep.subr.mxu0 0.0
  %614 = vmatpush1.msra.mxu0 0.0
  %615 = vmatprep.subr.mxu0 0.0
  %616 = vmatpush1.msra.mxu0 0.0
  %617 = vmatprep.subr.mxu0 0.0
  %618 = vmatpush1.msra.mxu0 0.0
  %619 = vmatprep.mubr.f32.mxu0 0.0
  %620 = vmatmul.mubr.f32.gmra.mrb[0].mxu0 %v553
  %v621 = vpop.f32.mrb[0].mxu0
  %v622 = vadd.f32 %v548, %v621
  %v623 = vpop.f32.mrb[0].mxu0
  %v624 = vadd.f32 %v548, %v623
  %625 = vdwg.mxu0
  %v626 = vmax.f32 %v622, -256.0
  %v627 = vmax.f32 %v624, -256.0
  %v628 = vmin.f32 %v626, 256.0
  %v629 = vmin.f32 %v627, 256.0
  %630 = vst [vmem:[%s4] sm:$0xff] %v532
  %631 = vst [vmem:[%s4 + $0x8] sm:$0xff] %v533
  %632 = vst [vmem:[%s4 + $0x10] sm:$0xff] %v534
  %633 = vst [vmem:[%s4 + $0x18] sm:$0xff] %v535
  %634 = vst [vmem:[%s4 + $0x20] sm:$0xff] %v536
  %635 = vst [vmem:[%s4 + $0x28] sm:$0xff] %v537
  %636 = vst [vmem:[%s4 + $0x30] sm:$0xff] %v538
  %637 = vst [vmem:[%s4 + $0x38] sm:$0xff] %v539
  %638 = vst [vmem:[%s4 + $0x40] sm:$0xff] %v628
  %639 = vst [vmem:[%s4 + $0x48] sm:$0xff] %v629
  %v640 = vlaneseq
  %v641 = vshrl.u32 %v640, 7
  %v642 = vsub.s32 1, %v641
  %v643 = vrot.slane %v202, %v642
  %v644 = vlaneseq
  %v645 = vshrl.u32 %v644, 7
  %v646 = vsub.s32 1, %v645
  %v647 = vrot.slane %v185, %v646
  %v648 = vmul.f32 %v101, %v643
  %v649 = vmul.f32 %v102, %v643
  %v650 = vmul.f32 %v103, %v647
  %v651 = vmul.f32 %v104, %v643
  %v652 = vmul.f32 %v105, %v643
  %v653 = vmul.f32 %v106, %v647
  %v654 = vmul.f32 %v107, %v643
  %v655 = vmul.f32 %v108, %v643
  %v656 = vmul.f32 %v109, %v647
  %v657 = vmul.f32 %v110, %v643
  %v658 = vmul.f32 %v111, %v643
  %v659 = vmul.f32 %v112, %v647
  %v660 = vmul.f32 %v648, %v648
  %v661 = vmul.f32 %v649, %v649
  %v662 = vmul.f32 %v650, %v650
  %v663 = vmul.f32 %v651, %v651
  %v664 = vmul.f32 %v652, %v652
  %v665 = vmul.f32 %v653, %v653
  %v666 = vmul.f32 %v654, %v654
  %v667 = vmul.f32 %v655, %v655
  %v668 = vmul.f32 %v656, %v656
  %v669 = vmul.f32 %v657, %v657
  %v670 = vmul.f32 %v658, %v658
  %v671 = vmul.f32 %v659, %v659
  %v672 = vadd.f32 %v660, %v661
  %v673 = vsel %vm198, %v662, 0.0
  %v674 = vadd.f32 %v672, %v673
  %675 = vadd.xlane.f32.xlu0 %v674
  %v676 = vpop.xlane.xlu0 %675
  %v677 = vadd.f32 %v663, %v664
  %v678 = vsel %vm198, %v665, 0.0
  %v679 = vadd.f32 %v677, %v678
  %680 = vadd.xlane.f32.xlu0 %v679
  %v681 = vpop.xlane.xlu0 %680
  %v682 = vadd.f32 %v666, %v667
  %v683 = vsel %vm198, %v668, 0.0
  %v684 = vadd.f32 %v682, %v683
  %685 = vadd.xlane.f32.xlu0 %v684
  %v686 = vpop.xlane.xlu0 %685
  %v687 = vadd.f32 %v669, %v670
  %v688 = vsel %vm198, %v671, 0.0
  %v689 = vadd.f32 %v687, %v688
  %690 = vadd.xlane.f32.xlu0 %v689
  %v691 = vpop.xlane.xlu0 %690
  %v692 = vadd.f32 %v676, 1e-08
  %v693 = vadd.f32 %v681, 1e-08
  %v694 = vadd.f32 %v686, 1e-08
  %v695 = vadd.f32 %v691, 1e-08
  %v696 = vrsqrt.pop %v692
  %v697 = vrsqrt.pop %v693
  %v698 = vrsqrt.pop %v694
  %v699 = vrsqrt.pop %v695
  %v700 = vmul.f32 %v696, 1.4142135
  %v701 = vmul.f32 %v697, 1.4142135
  %v702 = vmul.f32 %v698, 1.4142135
  %v703 = vmul.f32 %v699, 1.4142135
  %v704 = vmul.f32 %v648, %v700
  %v705 = vmul.f32 %v649, %v700
  %v706 = vmul.f32 %v650, %v700
  %v707 = vmul.f32 %v651, %v701
  %v708 = vmul.f32 %v652, %v701
  %v709 = vmul.f32 %v653, %v701
  %v710 = vmul.f32 %v654, %v702
  %v711 = vmul.f32 %v655, %v702
  %v712 = vmul.f32 %v656, %v702
  %v713 = vmul.f32 %v657, %v703
  %v714 = vmul.f32 %v658, %v703
  %v715 = vmul.f32 %v659, %v703
  %v717 = vsel %vm198, %v706, 0
  %v720 = vsel %vm198, %v709, 0
  %v723 = vsel %vm198, %v712, 0
  %v726 = vsel %vm198, %v715, 0
  %728 = vmatprep.subr.mxu0 %v30
  %729 = vmatpush1.msra.mxu0 %v29
  %730 = vmatprep.subr.mxu0 %v32
  %731 = vmatpush1.msra.mxu0 %v31
  %732 = vmatprep.subr.mxu0 %v34
  %733 = vmatpush1.msra.mxu0 %v33
  %734 = vmatprep.subr.mxu0 %v36
  %735 = vmatpush1.msra.mxu0 %v35
  %736 = vmatprep.subr.mxu0 %v38
  %737 = vmatpush1.msra.mxu0 %v37
  %738 = vmatprep.subr.mxu0 %v40
  %739 = vmatpush1.msra.mxu0 %v39
  %740 = vmatprep.subr.mxu0 %v42
  %741 = vmatpush1.msra.mxu0 %v41
  %742 = vmatprep.subr.mxu0 %v44
  %743 = vmatpush1.msra.mxu0 %v43
  %744 = vmatprep.subr.mxu0 %v46
  %745 = vmatpush1.msra.mxu0 %v45
  %746 = vmatprep.subr.mxu0 %v48
  %747 = vmatpush1.msra.mxu0 %v47
  %748 = vmatprep.subr.mxu0 %v50
  %749 = vmatpush1.msra.mxu0 %v49
  %750 = vmatprep.subr.mxu0 %v52
  %751 = vmatpush1.msra.mxu0 %v51
  %752 = vmatprep.subr.mxu0 %v54
  %753 = vmatpush1.msra.mxu0 %v53
  %754 = vmatprep.subr.mxu0 %v56
  %755 = vmatpush1.msra.mxu0 %v55
  %756 = vmatprep.subr.mxu0 %v58
  %757 = vmatpush1.msra.mxu0 %v57
  %758 = vmatprep.subr.mxu0 %v60
  %759 = vmatpush1.msra.mxu0 %v59
  %760 = vmatprep.subr.mxu0 %v62
  %761 = vmatpush1.msra.mxu0 %v61
  %762 = vmatprep.subr.mxu0 %v64
  %763 = vmatpush1.msra.mxu0 %v63
  %764 = vmatprep.subr.mxu0 %v66
  %765 = vmatpush1.msra.mxu0 %v65
  %766 = vmatprep.subr.mxu0 %v68
  %767 = vmatpush1.msra.mxu0 %v67
  %768 = vmatprep.subr.mxu0 %v70
  %769 = vmatpush1.msra.mxu0 %v69
  %770 = vmatprep.subr.mxu0 %v72
  %771 = vmatpush1.msra.mxu0 %v71
  %772 = vmatprep.subr.mxu0 %v74
  %773 = vmatpush1.msra.mxu0 %v73
  %774 = vmatprep.subr.mxu0 %v76
  %775 = vmatpush1.msra.mxu0 %v75
  %776 = vmatprep.subr.mxu0 %v78
  %777 = vmatpush1.msra.mxu0 %v77
  %778 = vmatprep.subr.mxu0 %v80
  %779 = vmatpush1.msra.mxu0 %v79
  %780 = vmatprep.subr.mxu0 %v82
  %781 = vmatpush1.msra.mxu0 %v81
  %782 = vmatprep.subr.mxu0 %v84
  %783 = vmatpush1.msra.mxu0 %v83
  %784 = vmatprep.subr.mxu0 %v86
  %785 = vmatpush1.msra.mxu0 %v85
  %786 = vmatprep.subr.mxu0 %v88
  %787 = vmatpush1.msra.mxu0 %v87
  %788 = vmatprep.subr.mxu0 %v90
  %789 = vmatpush1.msra.mxu0 %v89
  %790 = vmatprep.subr.mxu0 %v92
  %791 = vmatpush1.msra.mxu0 %v91
  %792 = vmatprep.mubr.f32.mxu0 %v705
  %793 = vmatmul.mubr.f32.gmra.mrb[0].mxu0 %v704
  %v794 = vpop.f32.mrb[0].mxu0
  %v795 = vadd.f32 %v283, %v794
  %v796 = vpop.f32.mrb[0].mxu0
  %v797 = vadd.f32 %v287, %v796
  %798 = vmatprep.mubr.f32.mxu0 %v708
  %799 = vmatmul.mubr.f32.gmra.mrb[0].mxu0 %v707
  %v800 = vpop.f32.mrb[0].mxu0
  %v801 = vadd.f32 %v283, %v800
  %v802 = vpop.f32.mrb[0].mxu0
  %v803 = vadd.f32 %v287, %v802
  %804 = vmatprep.mubr.f32.mxu0 %v711
  %805 = vmatmul.mubr.f32.gmra.mrb[0].mxu0 %v710
  %v806 = vpop.f32.mrb[0].mxu0
  %v807 = vadd.f32 %v283, %v806
  %v808 = vpop.f32.mrb[0].mxu0
  %v809 = vadd.f32 %v287, %v808
  %810 = vmatprep.mubr.f32.mxu0 %v714
  %811 = vmatmul.mubr.f32.gmra.mrb[0].mxu0 %v713
  %v812 = vpop.f32.mrb[0].mxu0
  %v813 = vadd.f32 %v283, %v812
  %v814 = vpop.f32.mrb[0].mxu0
  %v815 = vadd.f32 %v287, %v814
  %816 = vdwg.mxu0
  %817 = vmatprep.subr.mxu0 %v94
  %818 = vmatpush1.msra.mxu0 %v93
  %819 = vmatprep.subr.mxu0 %v96
  %820 = vmatpush1.msra.mxu0 %v95
  %821 = vmatprep.subr.mxu0 %v98
  %822 = vmatpush1.msra.mxu0 %v97
  %823 = vmatprep.subr.mxu0 %v100
  %824 = vmatpush1.msra.mxu0 %v99
  %825 = vmatprep.subr.mxu0 0.0
  %826 = vmatpush1.msra.mxu0 0.0
  %827 = vmatprep.subr.mxu0 0.0
  %828 = vmatpush1.msra.mxu0 0.0
  %829 = vmatprep.subr.mxu0 0.0
  %830 = vmatpush1.msra.mxu0 0.0
  %831 = vmatprep.subr.mxu0 0.0
  %832 = vmatpush1.msra.mxu0 0.0
  %833 = vmatprep.subr.mxu0 0.0
  %834 = vmatpush1.msra.mxu0 0.0
  %835 = vmatprep.subr.mxu0 0.0
  %836 = vmatpush1.msra.mxu0 0.0
  %837 = vmatprep.subr.mxu0 0.0
  %838 = vmatpush1.msra.mxu0 0.0
  %839 = vmatprep.subr.mxu0 0.0
  %840 = vmatpush1.msra.mxu0 0.0
  %841 = vmatprep.subr.mxu0 0.0
  %842 = vmatpush1.msra.mxu0 0.0
  %843 = vmatprep.subr.mxu0 0.0
  %844 = vmatpush1.msra.mxu0 0.0
  %845 = vmatprep.subr.mxu0 0.0
  %846 = vmatpush1.msra.mxu0 0.0
  %847 = vmatprep.subr.mxu0 0.0
  %848 = vmatpush1.msra.mxu0 0.0
  %849 = vmatprep.subr.mxu0 0.0
  %850 = vmatpush1.msra.mxu0 0.0
  %851 = vmatprep.subr.mxu0 0.0
  %852 = vmatpush1.msra.mxu0 0.0
  %853 = vmatprep.subr.mxu0 0.0
  %854 = vmatpush1.msra.mxu0 0.0
  %855 = vmatprep.subr.mxu0 0.0
  %856 = vmatpush1.msra.mxu0 0.0
  %857 = vmatprep.subr.mxu0 0.0
  %858 = vmatpush1.msra.mxu0 0.0
  %859 = vmatprep.subr.mxu0 0.0
  %860 = vmatpush1.msra.mxu0 0.0
  %861 = vmatprep.subr.mxu0 0.0
  %862 = vmatpush1.msra.mxu0 0.0
  %863 = vmatprep.subr.mxu0 0.0
  %864 = vmatpush1.msra.mxu0 0.0
  %865 = vmatprep.subr.mxu0 0.0
  %866 = vmatpush1.msra.mxu0 0.0
  %867 = vmatprep.subr.mxu0 0.0
  %868 = vmatpush1.msra.mxu0 0.0
  %869 = vmatprep.subr.mxu0 0.0
  %870 = vmatpush1.msra.mxu0 0.0
  %871 = vmatprep.subr.mxu0 0.0
  %872 = vmatpush1.msra.mxu0 0.0
  %873 = vmatprep.subr.mxu0 0.0
  %874 = vmatpush1.msra.mxu0 0.0
  %875 = vmatprep.subr.mxu0 0.0
  %876 = vmatpush1.msra.mxu0 0.0
  %877 = vmatprep.subr.mxu0 0.0
  %878 = vmatpush1.msra.mxu0 0.0
  %879 = vmatprep.subr.mxu0 0.0
  %880 = vmatpush1.msra.mxu0 0.0
  %881 = vmatprep.mubr.f32.mxu0 0.0
  %882 = vmatmul.mubr.f32.gmra.mrb[0].mxu0 %v717
  %v883 = vpop.f32.mrb[0].mxu0
  %v884 = vadd.f32 %v795, %v883
  %v885 = vpop.f32.mrb[0].mxu0
  %v886 = vadd.f32 %v797, %v885
  %887 = vmatprep.mubr.f32.mxu0 0.0
  %888 = vmatmul.mubr.f32.gmra.mrb[0].mxu0 %v720
  %v889 = vpop.f32.mrb[0].mxu0
  %v890 = vadd.f32 %v801, %v889
  %v891 = vpop.f32.mrb[0].mxu0
  %v892 = vadd.f32 %v803, %v891
  %893 = vmatprep.mubr.f32.mxu0 0.0
  %894 = vmatmul.mubr.f32.gmra.mrb[0].mxu0 %v723
  %v895 = vpop.f32.mrb[0].mxu0
  %v896 = vadd.f32 %v807, %v895
  %v897 = vpop.f32.mrb[0].mxu0
  %v898 = vadd.f32 %v809, %v897
  %899 = vmatprep.mubr.f32.mxu0 0.0
  %900 = vmatmul.mubr.f32.gmra.mrb[0].mxu0 %v726
  %v901 = vpop.f32.mrb[0].mxu0
  %v902 = vadd.f32 %v813, %v901
  %v903 = vpop.f32.mrb[0].mxu0
  %v904 = vadd.f32 %v815, %v903
  %905 = vdwg.mxu0
  %v906 = vadd.f32 %v884, %v483
  %v907 = vadd.f32 %v886, %v483
  %v908 = vadd.f32 %v890, %v488
  %v909 = vadd.f32 %v892, %v488
  %v910 = vadd.f32 %v896, %v493
  %v911 = vadd.f32 %v898, %v493
  %v912 = vadd.f32 %v902, %v498
  %v913 = vadd.f32 %v904, %v498
  %v914 = vmul.f32 %v906, 0.2
  %v915 = vmul.f32 %v907, 0.2
  %v916 = vmul.f32 %v908, 0.2
  %v917 = vmul.f32 %v909, 0.2
  %v918 = vmul.f32 %v910, 0.2
  %v919 = vmul.f32 %v911, 0.2
  %v920 = vmul.f32 %v912, 0.2
  %v921 = vmul.f32 %v913, 0.2
  %v922 = vmax.f32 %v906, %v914
  %v923 = vmax.f32 %v907, %v915
  %v924 = vmax.f32 %v908, %v916
  %v925 = vmax.f32 %v909, %v917
  %v926 = vmax.f32 %v910, %v918
  %v927 = vmax.f32 %v911, %v919
  %v928 = vmax.f32 %v912, %v920
  %v929 = vmax.f32 %v913, %v921
  %v930 = vmax.f32 %v922, -256.0
  %v931 = vmax.f32 %v923, -256.0
  %v932 = vmax.f32 %v924, -256.0
  %v933 = vmax.f32 %v925, -256.0
  %v934 = vmax.f32 %v926, -256.0
  %v935 = vmax.f32 %v927, -256.0
  %v936 = vmax.f32 %v928, -256.0
  %v937 = vmax.f32 %v929, -256.0
  %v938 = vmin.f32 %v930, 256.0
  %v939 = vmin.f32 %v931, 256.0
  %v940 = vmin.f32 %v932, 256.0
  %v941 = vmin.f32 %v933, 256.0
  %v942 = vmin.f32 %v934, 256.0
  %v943 = vmin.f32 %v935, 256.0
  %v944 = vmin.f32 %v936, 256.0
  %v945 = vmin.f32 %v937, 256.0
  %947 = vrot.lane.b32.xlu0 %v647, 32
  %v948 = vpop.permute.xlu0 %947
  %v950 = vmul.f32 %v26, %v948
  %952 = vrot.lane.b32.xlu0 %v950, 64
  %v953 = vpop.permute.xlu0 %952
  %v954 = vsel %vm198, %v953, 0
  %956 = vmatprep.subr.mxu0 %v939
  %957 = vmatpush1.msra.mxu0 %v938
  %958 = vmatprep.subr.mxu0 %v941
  %959 = vmatpush1.msra.mxu0 %v940
  %960 = vmatprep.subr.mxu0 %v943
  %961 = vmatpush1.msra.mxu0 %v942
  %962 = vmatprep.subr.mxu0 %v945
  %963 = vmatpush1.msra.mxu0 %v944
  %964 = vmatprep.subr.mxu0 0.0
  %965 = vmatpush1.msra.mxu0 0.0
  %966 = vmatprep.subr.mxu0 0.0
  %967 = vmatpush1.msra.mxu0 0.0
  %968 = vmatprep.subr.mxu0 0.0
  %969 = vmatpush1.msra.mxu0 0.0
  %970 = vmatprep.subr.mxu0 0.0
  %971 = vmatpush1.msra.mxu0 0.0
  %972 = vmatprep.subr.mxu0 0.0
  %973 = vmatpush1.msra.mxu0 0.0
  %974 = vmatprep.subr.mxu0 0.0
  %975 = vmatpush1.msra.mxu0 0.0
  %976 = vmatprep.subr.mxu0 0.0
  %977 = vmatpush1.msra.mxu0 0.0
  %978 = vmatprep.subr.mxu0 0.0
  %979 = vmatpush1.msra.mxu0 0.0
  %980 = vmatprep.subr.mxu0 0.0
  %981 = vmatpush1.msra.mxu0 0.0
  %982 = vmatprep.subr.mxu0 0.0
  %983 = vmatpush1.msra.mxu0 0.0
  %984 = vmatprep.subr.mxu0 0.0
  %985 = vmatpush1.msra.mxu0 0.0
  %986 = vmatprep.subr.mxu0 0.0
  %987 = vmatpush1.msra.mxu0 0.0
  %988 = vmatprep.subr.mxu0 0.0
  %989 = vmatpush1.msra.mxu0 0.0
  %990 = vmatprep.subr.mxu0 0.0
  %991 = vmatpush1.msra.mxu0 0.0
  %992 = vmatprep.subr.mxu0 0.0
  %993 = vmatpush1.msra.mxu0 0.0
  %994 = vmatprep.subr.mxu0 0.0
  %995 = vmatpush1.msra.mxu0 0.0
  %996 = vmatprep.subr.mxu0 0.0
  %997 = vmatpush1.msra.mxu0 0.0
  %998 = vmatprep.subr.mxu0 0.0
  %999 = vmatpush1.msra.mxu0 0.0
  %1000 = vmatprep.subr.mxu0 0.0
  %1001 = vmatpush1.msra.mxu0 0.0
  %1002 = vmatprep.subr.mxu0 0.0
  %1003 = vmatpush1.msra.mxu0 0.0
  %1004 = vmatprep.subr.mxu0 0.0
  %1005 = vmatpush1.msra.mxu0 0.0
  %1006 = vmatprep.subr.mxu0 0.0
  %1007 = vmatpush1.msra.mxu0 0.0
  %1008 = vmatprep.subr.mxu0 0.0
  %1009 = vmatpush1.msra.mxu0 0.0
  %1010 = vmatprep.subr.mxu0 0.0
  %1011 = vmatpush1.msra.mxu0 0.0
  %1012 = vmatprep.subr.mxu0 0.0
  %1013 = vmatpush1.msra.mxu0 0.0
  %1014 = vmatprep.subr.mxu0 0.0
  %1015 = vmatpush1.msra.mxu0 0.0
  %1016 = vmatprep.subr.mxu0 0.0
  %1017 = vmatpush1.msra.mxu0 0.0
  %1018 = vmatprep.subr.mxu0 0.0
  %1019 = vmatpush1.msra.mxu0 0.0
  %1020 = vmatprep.mubr.f32.mxu0 0.0
  %1021 = vmatmul.mubr.f32.gmra.mrb[0].mxu0 %v954
  %v1022 = vpop.f32.mrb[0].mxu0
  %v1023 = vadd.f32 %v548, %v1022
  %v1024 = vpop.f32.mrb[0].mxu0
  %v1025 = vadd.f32 %v548, %v1024
  %1026 = vdwg.mxu0
  %v1027 = vmax.f32 %v1023, -256.0
  %v1028 = vmax.f32 %v1025, -256.0
  %v1029 = vmin.f32 %v1027, 256.0
  %v1030 = vmin.f32 %v1028, 256.0
  %s1031 = scalar_lea.vmem %s4, 80
  %1032 = vst [vmem:[%s1031] sm:$0xff] %v938
  %1033 = vst [vmem:[%s1031 + $0x8] sm:$0xff] %v939
  %1034 = vst [vmem:[%s1031 + $0x10] sm:$0xff] %v940
  %1035 = vst [vmem:[%s1031 + $0x18] sm:$0xff] %v941
  %1036 = vst [vmem:[%s1031 + $0x20] sm:$0xff] %v942
  %1037 = vst [vmem:[%s1031 + $0x28] sm:$0xff] %v943
  %1038 = vst [vmem:[%s1031 + $0x30] sm:$0xff] %v944
  %1039 = vst [vmem:[%s1031 + $0x38] sm:$0xff] %v945
  %1040 = vst [vmem:[%s1031 + $0x40] sm:$0xff] %v1029
  %1041 = vst [vmem:[%s1031 + $0x48] sm:$0xff] %v1030
  // Predicated region
  $region18: #{ada_synthesis_block_forward.1} parent=0 // pred_check
    _
  $region19: #{ada_synthesis_block_forward.1} parent=0 // pred_check_branch
    %1043 = sbr.rel (0) target = $region21
  $region20: #{ada_synthesis_block_forward.1} parent=0 // pred_region
    _
  $region21: #{ada_synthesis_block_forward.1} parent=0 // pred_fallthru
    _
  // Predicated region
  $region22: #{ada_synthesis_block_forward.1} parent=0 // pred_check
    _
  $region23: #{ada_synthesis_block_forward.1} parent=0 // pred_check_branch
    %1045 = sbr.rel (0) target = $region25
  $region24: #{ada_synthesis_block_forward.1} parent=0 // pred_region
    _
  $region25: #{ada_synthesis_block_forward.1} parent=0 // pred_fallthru
    _

</llo_original>
